<compile_context>
chip_gen: v5e
topology: v5e:2x2
jax: 0.10.0
libtpu: 0.0.40
codegen_flags: <defaults>
</compile_context>

<pallas_src>
import functools

import jax
import jax.numpy as jnp
from jax.experimental import pallas as pl
from jax.experimental.pallas import tpu as pltpu

CPAD = 128  # lane-dense channel/class padding


# ----------------------------------------------------------------------------
# Fused Pallas kernel: whole TCN forward for ONE batch segment (grid over B)
# ----------------------------------------------------------------------------

def _tcn_fused_kernel(x_ref, w_ref, bias_ref, o_ref, xbuf, hbuf, *,
                      Lp, K, dilations, has_down, pada, seg, w_off, b_off):
    """One batch segment per grid step.

    Segment layout (built by the wrapper): [pada zero rows | Lp data rows],
    pada >= (K-1)*max(dilation) rounded up to 8 sublanes.  The zero prefix
    implements the causal left padding for every dilated conv.
    """
    # Single copy of this program's segment into the activation buffer.
    xbuf[...] = x_ref[...]
    # Only the causal prefix of the hidden buffer needs zeroing; its data rows
    # are fully overwritten every layer before being read.
    if pada > 0:
        hbuf[pl.ds(0, pada), :] = jnp.zeros((pada, CPAD), jnp.float32)

    def causal_conv(buf, w_row0, bias_row, d):
        # K accumulated bf16 MXU dots (no lane-concat im2col).
        # Weight tap k pairs with x[t - (K-1-k)*d]  (PyTorch conv + chomp).
        acc = None
        for k in range(K):
            shift = (K - 1 - k) * d
            tap = buf[pl.ds(pada - shift, Lp), :].astype(jnp.bfloat16)
            wk = w_ref[pl.ds(w_row0 + k * CPAD, CPAD), :]          # bf16 (128,128)
            part = jnp.dot(tap, wk, preferred_element_type=jnp.float32)
            acc = part if acc is None else acc + part
        return acc + bias_ref[pl.ds(bias_row, 1), :]

    for l, d in enumerate(dilations):
        # conv1 -> chomp -> relu   (dropout == identity in eval mode)
        h1 = jnp.maximum(causal_conv(xbuf, w_off["W1"] + l * K * CPAD,
                                     b_off["B1"] + l, d), 0.0)
        hbuf[pl.ds(pada, Lp), :] = h1

        # conv2 -> chomp -> relu
        h2 = jnp.maximum(causal_conv(hbuf, w_off["W2"] + l * K * CPAD,
                                     b_off["B2"] + l, d), 0.0)

        # residual: 1x1 conv when the channel count changes, identity otherwise
        xres = xbuf[pl.ds(pada, Lp), :]
        if has_down[l]:
            wd = w_ref[pl.ds(w_off["WD"] + l * CPAD, CPAD), :]
            res = (jnp.dot(xres.astype(jnp.bfloat16), wd,
                           preferred_element_type=jnp.float32)
                   + bias_ref[pl.ds(b_off["BD"] + l, 1), :])
        else:
            res = xres

        xbuf[pl.ds(pada, Lp), :] = jnp.maximum(h2 + res, 0.0)

    # Final Linear, fused: one dot on the sublane-aligned last-8-row tile and
    # one unmasked lane-dense (8,128) store.  The wrapper picks timestep L-1.
    tile = xbuf[pl.ds(seg - 8, 8), :].astype(jnp.bfloat16)
    lw = w_ref[pl.ds(w_off["LW"], CPAD), :]
    logits8 = (jnp.dot(tile, lw, preferred_element_type=jnp.float32)
               + bias_ref[pl.ds(b_off["LB"], 1), :])
    o_ref[...] = logits8[None].astype(o_ref.dtype)


# ----------------------------------------------------------------------------
# Wrapper
# ----------------------------------------------------------------------------

def tcn_forward(x_ncl, params):
    """x_ncl: (B, C_in, L) float32 (PyTorch NCL) -> (B, num_classes) logits."""
    B, Cin, L = x_ncl.shape
    cfg = params["config"]
    K = cfg["kernel_size"]
    dilations = cfg["dilations"]
    has_down = cfg["has_down"]
    num_classes = cfg["num_classes"]

    pad = (K - 1) * max(dilations)
    pada = ((pad + 7) // 8) * 8 if pad > 0 else 0   # sublane-aligned zero prefix
    Lp = ((L + 7) // 8) * 8                         # sublane-aligned data rows
    seg = pada + Lp

    # One-time layout plumbing at the model boundary: NCL -> per-batch
    # (seg, 128) lane-dense segments WITH the causal zero prefix built here.
    x = jnp.transpose(x_ncl, (0, 2, 1)).astype(jnp.float32)        # (B, L, Cin)
    x = jnp.pad(x, ((0, 0), (pada, Lp - L), (0, CPAD - Cin)))      # (B, seg, 128)
    x2d = x.reshape(B * seg, CPAD)

    W, BIAS = params["W"], params["BIAS"]

    kernel = functools.partial(
        _tcn_fused_kernel, Lp=Lp, K=K, dilations=dilations, has_down=has_down,
        pada=pada, seg=seg, w_off=cfg["w_off"], b_off=cfg["b_off"])

    nb = len(dilations)
    flops = B * (nb * (2 * K + 1) * 2 * Lp * CPAD * CPAD + 2 * 8 * CPAD * CPAD)
    bytes_accessed = (x2d.size * 4 + W.size * 2 + BIAS.size * 4
                      + B * 8 * CPAD * 4)

    out = pl.pallas_call(
        kernel,
        out_shape=jax.ShapeDtypeStruct((B, 8, CPAD), jnp.float32),
        grid=(B,),
        in_specs=[
            pl.BlockSpec((seg, CPAD), lambda b: (b, 0)),   # this batch's segment
            pl.BlockSpec(W.shape, lambda b: (0, 0)),       # grid-invariant weights
            pl.BlockSpec(BIAS.shape, lambda b: (0, 0)),    # grid-invariant biases
        ],
        out_specs=pl.BlockSpec((1, 8, CPAD), lambda b: (b, 0, 0)),
        scratch_shapes=[pltpu.VMEM((seg, CPAD), jnp.float32),   # activation buf
                        pltpu.VMEM((seg, CPAD), jnp.float32)],  # hidden buf
        compiler_params=pltpu.CompilerParams(
            dimension_semantics=("parallel",)),             # megacore on v7x
        cost_estimate=pl.CostEstimate(flops=flops, transcendentals=0,
                                      bytes_accessed=bytes_accessed),
    )(x2d, W, BIAS)

    row = 8 - 1 - (Lp - L)          # position of timestep L-1 in the tail tile
    return out[:, row, :num_classes]


# ----------------------------------------------------------------------------
# Parameters (deterministic, matches PyTorch init semantics)
# ----------------------------------------------------------------------------

def init_params(key, num_inputs, num_channels, num_classes, kernel_size):
    """All weights packed into ONE bf16 (rows,128) array, all biases into ONE
    f32 (rows,128) array; channel dims zero-padded to 128 lanes.
    weight_norm: effective weight == v at PyTorch init, so v is stored directly.
    """
    K = kernel_size
    nb = len(num_channels)
    dilations = tuple(2 ** i for i in range(nb))

    off_w1 = 0
    off_w2 = nb * K * CPAD
    off_wd = 2 * nb * K * CPAD
    off_lw = 2 * nb * K * CPAD + nb * CPAD
    w_rows = off_lw + CPAD
    b_rows = 3 * nb + 1

    W = jnp.zeros((w_rows, CPAD), jnp.float32)
    BIAS = jnp.zeros((b_rows, CPAD), jnp.float32)
    has_down = []
    in_c = num_inputs
    for l, out_c in enumerate(num_channels):
        key, k1, k2, k3, kb1, kb2, kb3 = jax.random.split(key, 7)
        w1 = 0.01 * jax.random.normal(k1, (K, in_c, out_c), jnp.float32)
        w2 = 0.01 * jax.random.normal(k2, (K, out_c, out_c), jnp.float32)
        b1 = 0.01 * jax.random.normal(kb1, (out_c,), jnp.float32)
        b2 = 0.01 * jax.random.normal(kb2, (out_c,), jnp.float32)
        for k in range(K):
            r1 = off_w1 + (l * K + k) * CPAD
            W = W.at[r1:r1 + in_c, :out_c].set(w1[k])
            r2 = off_w2 + (l * K + k) * CPAD
            W = W.at[r2:r2 + out_c, :out_c].set(w2[k])
        BIAS = BIAS.at[l, :out_c].set(b1)
        BIAS = BIAS.at[nb + l, :out_c].set(b2)
        if in_c != out_c:
            wd = 0.01 * jax.random.normal(k3, (in_c, out_c), jnp.float32)
            bd = 0.01 * jax.random.normal(kb3, (out_c,), jnp.float32)
            rd = off_wd + l * CPAD
            W = W.at[rd:rd + in_c, :out_c].set(wd)
            BIAS = BIAS.at[2 * nb + l, :out_c].set(bd)
            has_down.append(True)
        else:
            has_down.append(False)
        in_c = out_c

    key, kl, kbl = jax.random.split(key, 3)
    lw = 0.01 * jax.random.normal(kl, (in_c, num_classes), jnp.float32)
    lb = 0.01 * jax.random.normal(kbl, (num_classes,), jnp.float32)
    W = W.at[off_lw:off_lw + in_c, :num_classes].set(lw)
    BIAS = BIAS.at[3 * nb, :num_classes].set(lb)

    config = dict(kernel_size=K, num_classes=num_classes,
                  dilations=dilations, has_down=tuple(has_down),
                  w_off=dict(W1=off_w1, W2=off_w2, WD=off_wd, LW=off_lw),
                  b_off=dict(B1=0, B2=nb, BD=2 * nb, LB=3 * nb))
    # bf16 MXU operands (f32 accumulation in-kernel); halves weight DMA bytes.
    return dict(W=W.astype(jnp.bfloat16), BIAS=BIAS, config=config)


# ----------------------------------------------------------------------------
# Plain-JAX reference (same math, mirrors the bf16-operand / f32-acc precision)
# ----------------------------------------------------------------------------

def _tcn_reference(x_ncl, params):
    cfg = params["config"]
    K = cfg["kernel_size"]
    hi = jax.lax.Precision.HIGHEST
    W = params["W"].astype(jnp.float32)      # bf16-quantized weight values
    BIAS = params["BIAS"]
    off, boff = cfg["w_off"], cfg["b_off"]
    B, Cin, L = x_ncl.shape

    def q(a):  # mirror the kernel's bf16 MXU-operand rounding (f32 products)
        return a.astype(jnp.bfloat16).astype(jnp.float32)

    x = jnp.transpose(x_ncl, (0, 2, 1)).astype(jnp.float32)
    x = jnp.pad(x, ((0, 0), (0, 0), (0, CPAD - Cin)))

    def conv(h, w_row0, bias_row, d):
        pad = (K - 1) * d
        hp = jnp.pad(h, ((0, 0), (pad, 0), (0, 0)))
        acc = jnp.zeros((B, L, CPAD), jnp.float32)
        for k in range(K):
            tap = q(hp[:, k * d:k * d + L, :])
            wk = W[w_row0 + k * CPAD: w_row0 + (k + 1) * CPAD, :]
            acc = acc + jnp.einsum("blc,cd->bld", tap, wk, precision=hi)
        return acc + BIAS[bias_row][None, None, :]

    for l, d in enumerate(cfg["dilations"]):
        h1 = jax.nn.relu(conv(x, off["W1"] + l * K * CPAD, boff["B1"] + l, d))
        h2 = jax.nn.relu(conv(h1, off["W2"] + l * K * CPAD, boff["B2"] + l, d))
        if cfg["has_down"][l]:
            wd = W[off["WD"] + l * CPAD: off["WD"] + (l + 1) * CPAD, :]
            res = (jnp.einsum("blc,cd->bld", q(x), wd, precision=hi)
                   + BIAS[boff["BD"] + l][None, None, :])
        else:
            res = x
        x = jax.nn.relu(h2 + res)

    last = q(x[:, -1, :])
    lw = W[off["LW"]: off["LW"] + CPAD, :]
    logits = jnp.dot(last, lw, precision=hi) + BIAS[boff["LB"]][None, :]
    return logits[:, :cfg["num_classes"]]


# ----------------------------------------------------------------------------
# Main
# ----------------------------------------------------------------------------

if __name__ == "__main__":
    key = jax.random.PRNGKey(0)
    B, Cin, L = 2, 4, 16
    num_channels = [8, 16]
    num_classes = 5
    kernel_size = 2

    kp, kx = jax.random.split(key)
    params = init_params(kp, Cin, num_channels, num_classes, kernel_size)
    x = jax.random.normal(kx, (B, Cin, L), jnp.float32)   # NCL, like PyTorch

    out = jax.block_until_ready(tcn_forward(x, params))
    assert out.shape == (B, num_classes), out.shape
    assert bool(jnp.all(jnp.isfinite(out)))

    ref = jax.block_until_ready(_tcn_reference(x, params))
    assert bool(jnp.allclose(out, ref, rtol=1e-3, atol=1e-4)), (out, ref)

    print("KERNEL_OK")
</pallas_src>

<mosaic_0001>
module attributes {stable_mosaic.version = 11 : i64} {
  func.func @_tcn_fused_kernel(%arg0: i32, %arg1: memref<24x128xf32, #tpu.memory_space<vmem>>, %arg2: memref<1408x128xbf16, #tpu.memory_space<vmem>>, %arg3: memref<7x128xf32, #tpu.memory_space<vmem>>, %arg4: memref<1x8x128xf32, #tpu.memory_space<vmem>>, %arg5: memref<24x128xf32, #tpu.memory_space<vmem>>, %arg6: memref<24x128xf32, #tpu.memory_space<vmem>>) attributes {dimension_semantics = [#tpu.dimension_semantics<parallel>], iteration_bounds = array<i64: 2>, scalar_prefetch = 0 : i64, scratch_operands = 2 : i64, tpu.core_type = #tpu.core_type<tc>, window_params = [{transform_indices = @transform_0, window_bounds = array<i64: 24, 128>}, {pipeline_mode = #tpu.pipeline_mode<synchronous>, transform_indices = @transform_1, window_bounds = array<i64: 1408, 128>}, {pipeline_mode = #tpu.pipeline_mode<synchronous>, transform_indices = @transform_2, window_bounds = array<i64: 7, 128>}, {transform_indices = @transform_3, window_bounds = array<i64: 1, 8, 128>}]} {
    %c0 = arith.constant 0 : index
    %c0_0 = arith.constant 0 : index
    %0 = vector.load %arg1[%c0, %c0_0] : memref<24x128xf32, #tpu.memory_space<vmem>>, vector<24x128xf32>
    %c0_1 = arith.constant 0 : index
    %c0_2 = arith.constant 0 : index
    %1 = vector.load %arg5[%c0_1, %c0_2] : memref<24x128xf32, #tpu.memory_space<vmem>>, vector<24x128xf32>
    tpu.vector_store %arg5[%c0_1, %c0_2], %0 {strides = array<i32>} : memref<24x128xf32, #tpu.memory_space<vmem>>, vector<24x128xf32>,
    %cst = arith.constant 0.000000e+00 : f32
    %2 = vector.broadcast %cst : f32 to vector<8x128xf32>
    %c0_3 = arith.constant 0 : index
    %c0_4 = arith.constant 0 : index
    %3 = vector.load %arg6[%c0_3, %c0_4] : memref<24x128xf32, #tpu.memory_space<vmem>>, vector<8x128xf32>
    tpu.vector_store %arg6[%c0_3, %c0_4], %2 {strides = array<i32>} : memref<24x128xf32, #tpu.memory_space<vmem>>, vector<8x128xf32>,
    %c7 = arith.constant 7 : index
    %c0_5 = arith.constant 0 : index
    %4 = vector.load %arg5[%c7, %c0_5] : memref<24x128xf32, #tpu.memory_space<vmem>>, vector<16x128xf32>
    %5 = arith.truncf %4 : vector<16x128xf32> to vector<16x128xbf16>
    %c0_6 = arith.constant 0 : index
    %c0_7 = arith.constant 0 : index
    %6 = vector.load %arg2[%c0_6, %c0_7] : memref<1408x128xbf16, #tpu.memory_space<vmem>>, vector<128x128xbf16>
    %cst_8 = arith.constant dense<0.000000e+00> : vector<16x128xf32>
    %7 = tpu.matmul %5, %6, %cst_8 {dimension_numbers = #tpu.dot_dimension_numbers<[1], [0], [0], [1], [0, 0, 1, 1], [], []>} : vector<16x128xbf16>, vector<128x128xbf16>, vector<16x128xf32> -> vector<16x128xf32>
    %c8 = arith.constant 8 : index
    %c0_9 = arith.constant 0 : index
    %8 = vector.load %arg5[%c8, %c0_9] : memref<24x128xf32, #tpu.memory_space<vmem>>, vector<16x128xf32>
    %9 = arith.truncf %8 : vector<16x128xf32> to vector<16x128xbf16>
    %c128 = arith.constant 128 : index
    %c0_10 = arith.constant 0 : index
    %10 = vector.load %arg2[%c128, %c0_10] : memref<1408x128xbf16, #tpu.memory_space<vmem>>, vector<128x128xbf16>
    %cst_11 = arith.constant dense<0.000000e+00> : vector<16x128xf32>
    %11 = tpu.matmul %9, %10, %cst_11 {dimension_numbers = #tpu.dot_dimension_numbers<[1], [0], [0], [1], [0, 0, 1, 1], [], []>} : vector<16x128xbf16>, vector<128x128xbf16>, vector<16x128xf32> -> vector<16x128xf32>
    %12 = arith.addf %7, %11 : vector<16x128xf32>
    %c0_12 = arith.constant 0 : index
    %c0_13 = arith.constant 0 : index
    %13 = vector.load %arg3[%c0_12, %c0_13] : memref<7x128xf32, #tpu.memory_space<vmem>>, vector<1x128xf32>
    %14 = vector.broadcast %13 : vector<1x128xf32> to vector<16x128xf32>
    %15 = arith.addf %12, %14 : vector<16x128xf32>
    %cst_14 = arith.constant 0.000000e+00 : f32
    %16 = vector.broadcast %cst_14 : f32 to vector<16x128xf32>
    %17 = arith.maximumf %15, %16 : vector<16x128xf32>
    %c8_15 = arith.constant 8 : index
    %c0_16 = arith.constant 0 : index
    %18 = vector.load %arg6[%c8_15, %c0_16] : memref<24x128xf32, #tpu.memory_space<vmem>>, vector<16x128xf32>
    tpu.vector_store %arg6[%c8_15, %c0_16], %17 {strides = array<i32>} : memref<24x128xf32, #tpu.memory_space<vmem>>, vector<16x128xf32>,
    %c7_17 = arith.constant 7 : index
    %c0_18 = arith.constant 0 : index
    %19 = vector.load %arg6[%c7_17, %c0_18] : memref<24x128xf32, #tpu.memory_space<vmem>>, vector<16x128xf32>
    %20 = arith.truncf %19 : vector<16x128xf32> to vector<16x128xbf16>
    %c512 = arith.constant 512 : index
    %c0_19 = arith.constant 0 : index
    %21 = vector.load %arg2[%c512, %c0_19] : memref<1408x128xbf16, #tpu.memory_space<vmem>>, vector<128x128xbf16>
    %cst_20 = arith.constant dense<0.000000e+00> : vector<16x128xf32>
    %22 = tpu.matmul %20, %21, %cst_20 {dimension_numbers = #tpu.dot_dimension_numbers<[1], [0], [0], [1], [0, 0, 1, 1], [], []>} : vector<16x128xbf16>, vector<128x128xbf16>, vector<16x128xf32> -> vector<16x128xf32>
    %c8_21 = arith.constant 8 : index
    %c0_22 = arith.constant 0 : index
    %23 = vector.load %arg6[%c8_21, %c0_22] : memref<24x128xf32, #tpu.memory_space<vmem>>, vector<16x128xf32>
    %24 = arith.truncf %23 : vector<16x128xf32> to vector<16x128xbf16>
    %c640 = arith.constant 640 : index
    %c0_23 = arith.constant 0 : index
    %25 = vector.load %arg2[%c640, %c0_23] : memref<1408x128xbf16, #tpu.memory_space<vmem>>, vector<128x128xbf16>
    %cst_24 = arith.constant dense<0.000000e+00> : vector<16x128xf32>
    %26 = tpu.matmul %24, %25, %cst_24 {dimension_numbers = #tpu.dot_dimension_numbers<[1], [0], [0], [1], [0, 0, 1, 1], [], []>} : vector<16x128xbf16>, vector<128x128xbf16>, vector<16x128xf32> -> vector<16x128xf32>
    %27 = arith.addf %22, %26 : vector<16x128xf32>
    %c2 = arith.constant 2 : index
    %c0_25 = arith.constant 0 : index
    %28 = vector.load %arg3[%c2, %c0_25] : memref<7x128xf32, #tpu.memory_space<vmem>>, vector<1x128xf32>
    %29 = vector.broadcast %28 : vector<1x128xf32> to vector<16x128xf32>
    %30 = arith.addf %27, %29 : vector<16x128xf32>
    %cst_26 = arith.constant 0.000000e+00 : f32
    %31 = vector.broadcast %cst_26 : f32 to vector<16x128xf32>
    %32 = arith.maximumf %30, %31 : vector<16x128xf32>
    %c8_27 = arith.constant 8 : index
    %c0_28 = arith.constant 0 : index
    %33 = vector.load %arg5[%c8_27, %c0_28] : memref<24x128xf32, #tpu.memory_space<vmem>>, vector<16x128xf32>
    %c1024 = arith.constant 1024 : index
    %c0_29 = arith.constant 0 : index
    %34 = vector.load %arg2[%c1024, %c0_29] : memref<1408x128xbf16, #tpu.memory_space<vmem>>, vector<128x128xbf16>
    %35 = arith.truncf %33 : vector<16x128xf32> to vector<16x128xbf16>
    %cst_30 = arith.constant dense<0.000000e+00> : vector<16x128xf32>
    %36 = tpu.matmul %35, %34, %cst_30 {dimension_numbers = #tpu.dot_dimension_numbers<[1], [0], [0], [1], [0, 0, 1, 1], [], []>} : vector<16x128xbf16>, vector<128x128xbf16>, vector<16x128xf32> -> vector<16x128xf32>
    %c4 = arith.constant 4 : index
    %c0_31 = arith.constant 0 : index
    %37 = vector.load %arg3[%c4, %c0_31] : memref<7x128xf32, #tpu.memory_space<vmem>>, vector<1x128xf32>
    %38 = vector.broadcast %37 : vector<1x128xf32> to vector<16x128xf32>
    %39 = arith.addf %36, %38 : vector<16x128xf32>
    %40 = arith.addf %32, %39 : vector<16x128xf32>
    %cst_32 = arith.constant 0.000000e+00 : f32
    %41 = vector.broadcast %cst_32 : f32 to vector<16x128xf32>
    %42 = arith.maximumf %40, %41 : vector<16x128xf32>
    %c8_33 = arith.constant 8 : index
    %c0_34 = arith.constant 0 : index
    %43 = vector.load %arg5[%c8_33, %c0_34] : memref<24x128xf32, #tpu.memory_space<vmem>>, vector<16x128xf32>
    tpu.vector_store %arg5[%c8_33, %c0_34], %42 {strides = array<i32>} : memref<24x128xf32, #tpu.memory_space<vmem>>, vector<16x128xf32>,
    %c6 = arith.constant 6 : index
    %c0_35 = arith.constant 0 : index
    %44 = vector.load %arg5[%c6, %c0_35] : memref<24x128xf32, #tpu.memory_space<vmem>>, vector<16x128xf32>
    %45 = arith.truncf %44 : vector<16x128xf32> to vector<16x128xbf16>
    %c256 = arith.constant 256 : index
    %c0_36 = arith.constant 0 : index
    %46 = vector.load %arg2[%c256, %c0_36] : memref<1408x128xbf16, #tpu.memory_space<vmem>>, vector<128x128xbf16>
    %cst_37 = arith.constant dense<0.000000e+00> : vector<16x128xf32>
    %47 = tpu.matmul %45, %46, %cst_37 {dimension_numbers = #tpu.dot_dimension_numbers<[1], [0], [0], [1], [0, 0, 1, 1], [], []>} : vector<16x128xbf16>, vector<128x128xbf16>, vector<16x128xf32> -> vector<16x128xf32>
    %c8_38 = arith.constant 8 : index
    %c0_39 = arith.constant 0 : index
    %48 = vector.load %arg5[%c8_38, %c0_39] : memref<24x128xf32, #tpu.memory_space<vmem>>, vector<16x128xf32>
    %49 = arith.truncf %48 : vector<16x128xf32> to vector<16x128xbf16>
    %c384 = arith.constant 384 : index
    %c0_40 = arith.constant 0 : index
    %50 = vector.load %arg2[%c384, %c0_40] : memref<1408x128xbf16, #tpu.memory_space<vmem>>, vector<128x128xbf16>
    %cst_41 = arith.constant dense<0.000000e+00> : vector<16x128xf32>
    %51 = tpu.matmul %49, %50, %cst_41 {dimension_numbers = #tpu.dot_dimension_numbers<[1], [0], [0], [1], [0, 0, 1, 1], [], []>} : vector<16x128xbf16>, vector<128x128xbf16>, vector<16x128xf32> -> vector<16x128xf32>
    %52 = arith.addf %47, %51 : vector<16x128xf32>
    %c1 = arith.constant 1 : index
    %c0_42 = arith.constant 0 : index
    %53 = vector.load %arg3[%c1, %c0_42] : memref<7x128xf32, #tpu.memory_space<vmem>>, vector<1x128xf32>
    %54 = vector.broadcast %53 : vector<1x128xf32> to vector<16x128xf32>
    %55 = arith.addf %52, %54 : vector<16x128xf32>
    %cst_43 = arith.constant 0.000000e+00 : f32
    %56 = vector.broadcast %cst_43 : f32 to vector<16x128xf32>
    %57 = arith.maximumf %55, %56 : vector<16x128xf32>
    %c8_44 = arith.constant 8 : index
    %c0_45 = arith.constant 0 : index
    %58 = vector.load %arg6[%c8_44, %c0_45] : memref<24x128xf32, #tpu.memory_space<vmem>>, vector<16x128xf32>
    tpu.vector_store %arg6[%c8_44, %c0_45], %57 {strides = array<i32>} : memref<24x128xf32, #tpu.memory_space<vmem>>, vector<16x128xf32>,
    %c6_46 = arith.constant 6 : index
    %c0_47 = arith.constant 0 : index
    %59 = vector.load %arg6[%c6_46, %c0_47] : memref<24x128xf32, #tpu.memory_space<vmem>>, vector<16x128xf32>
    %60 = arith.truncf %59 : vector<16x128xf32> to vector<16x128xbf16>
    %c768 = arith.constant 768 : index
    %c0_48 = arith.constant 0 : index
    %61 = vector.load %arg2[%c768, %c0_48] : memref<1408x128xbf16, #tpu.memory_space<vmem>>, vector<128x128xbf16>
    %cst_49 = arith.constant dense<0.000000e+00> : vector<16x128xf32>
    %62 = tpu.matmul %60, %61, %cst_49 {dimension_numbers = #tpu.dot_dimension_numbers<[1], [0], [0], [1], [0, 0, 1, 1], [], []>} : vector<16x128xbf16>, vector<128x128xbf16>, vector<16x128xf32> -> vector<16x128xf32>
    %c8_50 = arith.constant 8 : index
    %c0_51 = arith.constant 0 : index
    %63 = vector.load %arg6[%c8_50, %c0_51] : memref<24x128xf32, #tpu.memory_space<vmem>>, vector<16x128xf32>
    %64 = arith.truncf %63 : vector<16x128xf32> to vector<16x128xbf16>
    %c896 = arith.constant 896 : index
    %c0_52 = arith.constant 0 : index
    %65 = vector.load %arg2[%c896, %c0_52] : memref<1408x128xbf16, #tpu.memory_space<vmem>>, vector<128x128xbf16>
    %cst_53 = arith.constant dense<0.000000e+00> : vector<16x128xf32>
    %66 = tpu.matmul %64, %65, %cst_53 {dimension_numbers = #tpu.dot_dimension_numbers<[1], [0], [0], [1], [0, 0, 1, 1], [], []>} : vector<16x128xbf16>, vector<128x128xbf16>, vector<16x128xf32> -> vector<16x128xf32>
    %67 = arith.addf %62, %66 : vector<16x128xf32>
    %c3 = arith.constant 3 : index
    %c0_54 = arith.constant 0 : index
    %68 = vector.load %arg3[%c3, %c0_54] : memref<7x128xf32, #tpu.memory_space<vmem>>, vector<1x128xf32>
    %69 = vector.broadcast %68 : vector<1x128xf32> to vector<16x128xf32>
    %70 = arith.addf %67, %69 : vector<16x128xf32>
    %cst_55 = arith.constant 0.000000e+00 : f32
    %71 = vector.broadcast %cst_55 : f32 to vector<16x128xf32>
    %72 = arith.maximumf %70, %71 : vector<16x128xf32>
    %c8_56 = arith.constant 8 : index
    %c0_57 = arith.constant 0 : index
    %73 = vector.load %arg5[%c8_56, %c0_57] : memref<24x128xf32, #tpu.memory_space<vmem>>, vector<16x128xf32>
    %c1152 = arith.constant 1152 : index
    %c0_58 = arith.constant 0 : index
    %74 = vector.load %arg2[%c1152, %c0_58] : memref<1408x128xbf16, #tpu.memory_space<vmem>>, vector<128x128xbf16>
    %75 = arith.truncf %73 : vector<16x128xf32> to vector<16x128xbf16>
    %cst_59 = arith.constant dense<0.000000e+00> : vector<16x128xf32>
    %76 = tpu.matmul %75, %74, %cst_59 {dimension_numbers = #tpu.dot_dimension_numbers<[1], [0], [0], [1], [0, 0, 1, 1], [], []>} : vector<16x128xbf16>, vector<128x128xbf16>, vector<16x128xf32> -> vector<16x128xf32>
    %c5 = arith.constant 5 : index
    %c0_60 = arith.constant 0 : index
    %77 = vector.load %arg3[%c5, %c0_60] : memref<7x128xf32, #tpu.memory_space<vmem>>, vector<1x128xf32>
    %78 = vector.broadcast %77 : vector<1x128xf32> to vector<16x128xf32>
    %79 = arith.addf %76, %78 : vector<16x128xf32>
    %80 = arith.addf %72, %79 : vector<16x128xf32>
    %cst_61 = arith.constant 0.000000e+00 : f32
    %81 = vector.broadcast %cst_61 : f32 to vector<16x128xf32>
    %82 = arith.maximumf %80, %81 : vector<16x128xf32>
    %c8_62 = arith.constant 8 : index
    %c0_63 = arith.constant 0 : index
    %83 = vector.load %arg5[%c8_62, %c0_63] : memref<24x128xf32, #tpu.memory_space<vmem>>, vector<16x128xf32>
    tpu.vector_store %arg5[%c8_62, %c0_63], %82 {strides = array<i32>} : memref<24x128xf32, #tpu.memory_space<vmem>>, vector<16x128xf32>,
    %c16 = arith.constant 16 : index
    %c0_64 = arith.constant 0 : index
    %84 = vector.load %arg5[%c16, %c0_64] : memref<24x128xf32, #tpu.memory_space<vmem>>, vector<8x128xf32>
    %85 = arith.truncf %84 : vector<8x128xf32> to vector<8x128xbf16>
    %c1280 = arith.constant 1280 : index
    %c0_65 = arith.constant 0 : index
    %86 = vector.load %arg2[%c1280, %c0_65] : memref<1408x128xbf16, #tpu.memory_space<vmem>>, vector<128x128xbf16>
    %cst_66 = arith.constant dense<0.000000e+00> : vector<8x128xf32>
    %87 = tpu.matmul %85, %86, %cst_66 {dimension_numbers = #tpu.dot_dimension_numbers<[1], [0], [0], [1], [0, 0, 1, 1], [], []>} : vector<8x128xbf16>, vector<128x128xbf16>, vector<8x128xf32> -> vector<8x128xf32>
    %c6_67 = arith.constant 6 : index
    %c0_68 = arith.constant 0 : index
    %88 = vector.load %arg3[%c6_67, %c0_68] : memref<7x128xf32, #tpu.memory_space<vmem>>, vector<1x128xf32>
    %89 = vector.broadcast %88 : vector<1x128xf32> to vector<8x128xf32>
    %90 = arith.addf %87, %89 : vector<8x128xf32>
    %91 = vector.shape_cast %90 : vector<8x128xf32> to vector<1x8x128xf32>
    %c0_69 = arith.constant 0 : index
    %c0_70 = arith.constant 0 : index
    %c0_71 = arith.constant 0 : index
    %92 = vector.load %arg4[%c0_69, %c0_70, %c0_71] : memref<1x8x128xf32, #tpu.memory_space<vmem>>, vector<1x8x128xf32>
    tpu.vector_store %arg4[%c0_69, %c0_70, %c0_71], %91 {strides = array<i32>} : memref<1x8x128xf32, #tpu.memory_space<vmem>>, vector<1x8x128xf32>,
    return
  }
  func.func @transform_0(%arg0: i32) -> (i32, i32) {
    %c0_i32 = arith.constant 0 : i32
    %c0_i32_0 = arith.constant 0 : i32
    return %arg0, %c0_i32 : i32, i32
  }
  func.func @transform_1(%arg0: i32) -> (i32, i32) {
    %c0_i32 = arith.constant 0 : i32
    %c0_i32_0 = arith.constant 0 : i32
    %c0_i32_1 = arith.constant 0 : i32
    return %c0_i32, %c0_i32_0 : i32, i32
  }
  func.func @transform_2(%arg0: i32) -> (i32, i32) {
    %c0_i32 = arith.constant 0 : i32
    %c0_i32_0 = arith.constant 0 : i32
    %c0_i32_1 = arith.constant 0 : i32
    return %c0_i32, %c0_i32_0 : i32, i32
  }
  func.func @transform_3(%arg0: i32) -> (i32, i32, i32) {
    %c0_i32 = arith.constant 0 : i32
    %c0_i32_0 = arith.constant 0 : i32
    %c0_i32_1 = arith.constant 0 : i32
    return %arg0, %c0_i32, %c0_i32_0 : i32, i32, i32
  }
}

</mosaic_0001>

<llo_original>
// kernel: tpu_custom_call.1
$region0: #{tpu_custom_call.1}
  #allocation0 [shape = 'u32[]', space=smem, size = 0x4, offset = 0x4, fixed_abs, tag = 'smem constant byte address 0x4 - core index']
  #allocation1 [shape = 'u32[72,128]{1,0:T(1,128)}', space=vmem, size = 0x9000, scoped, tag = 'internal scratch']
  #allocation2 [shape = 'f32[24,128]{1,0:T(8,128)}', space=vmem, size = 0x3000, scoped, tag = 'scratch operand']
  #allocation3 [shape = 'f32[24,128]{1,0:T(8,128)}', space=vmem, size = 0x3000, scoped, tag = 'scratch operand']
  %s0 = inlined_call_operand.hbm [shape: f32[48,128], index: 0, kind: input, shape index: {}]
  %s1 = inlined_call_operand.hbm [shape: bf16[1408,128], index: 1, kind: input, shape index: {}]
  %s2 = inlined_call_operand.hbm [shape: f32[7,128], index: 2, kind: input, shape index: {}]
  %s3 = inlined_call_operand.hbm [shape: f32[2,8,128], index: 3, kind: output, shape index: {}]
  %s4 = sld [smem:[#allocation0]]
  $region57: #{tpu_custom_call.1} parent=0
    _
  %s6 = ssub.s32 1, %s4
  %s7 = scalar_select 0, %s6, %s4
  $region1: #{tpu_custom_call.1} parent=0
    #allocation4 [shape = 'u8[24576]{0}', space=vmem, size = 0x6000, scoped, tag = 'input window, operand 0']
    #allocation5 [shape = 's32[2]{0}', space=sflag, size = 0x8, scoped, tag = 'scoped memory for tpu_custom_call.1']
    #allocation6 [shape = 's32[2]{0}', space=sflag, size = 0x8, scoped, tag = 'scoped memory for tpu_custom_call.1']
    #allocation7 [shape = 'u8[360448]{0}', space=vmem, size = 0x58000, scoped, tag = 'input window, operand 1, single buffered']
    #allocation8 [shape = 's32[1]{0}', space=sflag, size = 0x4, scoped, tag = 'scoped memory for tpu_custom_call.1']
    #allocation9 [shape = 'u8[4096]{0}', space=vmem, size = 0x1000, scoped, tag = 'input window, operand 2, single buffered']
    #allocation10 [shape = 'u8[8192]{0}', space=vmem, size = 0x2000, scoped, tag = 'output window, operand 0']
    %8 = vsyncpa [#allocation5], 0
    %s9 = scalar_lea.sflag [#allocation5], 1
    %10 = vsyncpa %s9, 0
    %11 = vsyncpa [#allocation8], 0
    %12 = vsyncpa [#allocation6], 0
    %s13 = scalar_lea.sflag [#allocation6], 1
    %14 = vsyncpa %s13, 0
    loop: start=0, step=1, limit=4
    $region2: #{tpu_custom_call.1} parent=1 // loop_pre_header
      _
    $region3: #{tpu_custom_call.1} parent=1 // loop_header
      %s16 = sphi 0, %s20
      %p17 = scmp.ge.s32.totalorder %s16, 4
      %s26 = sphi 0, %s28
      %s29 = sphi 0, %s26
      %s30 = sphi 0, %s29
      %s46 = sphi 0, %s30
      %s50 = sphi 0, %s50
      %s52 = sphi 0, %s50
      %s53 = sphi 0, %s52
      %s67 = sphi 0, %s53
      %s71 = sphi 0, %s71
      %s73 = sphi 0, %s71
      %s74 = sphi 0, %s73
      %s88 = sphi 0, %s74
      %s94 = sphi 0, %s96
      %s97 = sphi 0, %s94
      %s98 = sphi 0, %s97
      %s114 = sphi 0, %s98
    $region4: #{tpu_custom_call.1} parent=1 // loop_header_branch
      %19 = sbr.rel (%p17) target = $region8
    $region5: #{tpu_custom_call.1} parent=1 // loop_body
      %s21 = ssub.s32 %s16, 1
      %s22 = ssub.s32 %s16, 2
      %s23 = sadd.s32 %s16, 1
      %s24 = ssub.s32 %s16, %s23
      %p25 = scmp.eq.s32.totalorder %s24, 0
      %s27 = sadd.s32 %s26, 1
      %s28 = scalar_select %p25, %s26, %s27
      %p31 = pneg %p25
      %p32 = scmp.eq.s32.totalorder %s16, 1
      %p33 = por %p31, %p32
      %p34 = scmp.ne.s32.totalorder %s26, %s29
      %p35 = scmp.eq.s32.totalorder %s16, 0
      %p36 = por %p34, %p35
      %p37 = scmp.ne.s32.totalorder %s26, %s29
      %p38 = scmp.eq.s32.totalorder %s21, 1
      %p39 = por %p37, %p38
      %p40 = scmp.ne.s32.totalorder %s29, %s30
      %p41 = scmp.eq.s32.totalorder %s21, 0
      %p42 = por %p40, %p41
      %p43 = scmp.ne.s32.totalorder %s29, %s30
      %p44 = scmp.eq.s32.totalorder %s22, 1
      %p45 = por %p43, %p44
      %p47 = scmp.ne.s32.totalorder %s30, %s46
      %p48 = scmp.eq.s32.totalorder %s22, 0
      %p49 = por %p47, %p48
      %s51 = sadd.s32 %s50, 1
      %p54 = scmp.eq.s32.totalorder %s16, 1
      %p55 = scmp.ne.s32.totalorder %s50, %s52
      %p56 = scmp.eq.s32.totalorder %s16, 0
      %p57 = por %p55, %p56
      %p58 = scmp.ne.s32.totalorder %s50, %s52
      %p59 = scmp.eq.s32.totalorder %s21, 1
      %p60 = por %p58, %p59
      %p61 = scmp.ne.s32.totalorder %s52, %s53
      %p62 = scmp.eq.s32.totalorder %s21, 0
      %p63 = por %p61, %p62
      %p64 = scmp.ne.s32.totalorder %s52, %s53
      %p65 = scmp.eq.s32.totalorder %s22, 1
      %p66 = por %p64, %p65
      %p68 = scmp.ne.s32.totalorder %s53, %s67
      %p69 = scmp.eq.s32.totalorder %s22, 0
      %p70 = por %p68, %p69
      %s72 = sadd.s32 %s71, 1
      %p75 = scmp.eq.s32.totalorder %s16, 1
      %p76 = scmp.ne.s32.totalorder %s71, %s73
      %p77 = scmp.eq.s32.totalorder %s16, 0
      %p78 = por %p76, %p77
      %p79 = scmp.ne.s32.totalorder %s71, %s73
      %p80 = scmp.eq.s32.totalorder %s21, 1
      %p81 = por %p79, %p80
      %p82 = scmp.ne.s32.totalorder %s73, %s74
      %p83 = scmp.eq.s32.totalorder %s21, 0
      %p84 = por %p82, %p83
      %p85 = scmp.ne.s32.totalorder %s73, %s74
      %p86 = scmp.eq.s32.totalorder %s22, 1
      %p87 = por %p85, %p86
      %p89 = scmp.ne.s32.totalorder %s74, %s88
      %p90 = scmp.eq.s32.totalorder %s22, 0
      %p91 = por %p89, %p90
      %s92 = ssub.s32 %s16, %s23
      %p93 = scmp.eq.s32.totalorder %s92, 0
      %s95 = sadd.s32 %s94, 1
      %s96 = scalar_select %p93, %s94, %s95
      %p99 = pneg %p93
      %p100 = scmp.eq.s32.totalorder %s16, 1
      %p101 = por %p99, %p100
      %p102 = scmp.ne.s32.totalorder %s94, %s97
      %p103 = scmp.eq.s32.totalorder %s16, 0
      %p104 = por %p102, %p103
      %p105 = scmp.ne.s32.totalorder %s94, %s97
      %p106 = scmp.eq.s32.totalorder %s21, 1
      %p107 = por %p105, %p106
      %p108 = scmp.ne.s32.totalorder %s97, %s98
      %p109 = scmp.eq.s32.totalorder %s21, 0
      %p110 = por %p108, %p109
      %p111 = scmp.ne.s32.totalorder %s97, %s98
      %p112 = scmp.eq.s32.totalorder %s22, 1
      %p113 = por %p111, %p112
      %p115 = scmp.ne.s32.totalorder %s98, %s114
      %p116 = scmp.eq.s32.totalorder %s22, 0
      %p117 = por %p115, %p116
      %p118 = scmp.le.s32.totalorder 1, %s16
      %p119 = scmp.lt.s32.totalorder %s16, 3
      %p120 = pnand %p118, %p119
      %p121 = pneg %p120
      // Predicated region
      $region9: #{tpu_custom_call.1} parent=5 // pred_check
        _
      $region10: #{tpu_custom_call.1} parent=5 // pred_check_branch
        %123 = sbr.rel (%p120) target = $region12
      $region11: #{tpu_custom_call.1} parent=5 // pred_region
        %s124 = ssub.s32 %s16, 1
        // Predicated region
        $region13: #{tpu_custom_call.1} parent=11 // pred_check
          %p125 = pneg %p63
        $region14: #{tpu_custom_call.1} parent=11 // pred_check_branch
          %127 = sbr.rel (%p125) target = $region16
        $region15: #{tpu_custom_call.1} parent=11 // pred_region
          %129 = vsyncadd [#allocation8], 0
          %s130 = sshll.u32 %s1, 4
          %s131 = int_to_ptr.hbm [resolvable:$true] %s130
          %s132 = sshll.u32 [#allocation7], 4
          %s133 = int_to_ptr.vmem [resolvable:$true] %s132
          %138 = dma.hbm_to_vmem [thread:$0]  %s131, 11264, %s133, [#allocation8], 64, 64, 4
        $region16: #{tpu_custom_call.1} parent=11 // pred_fallthru
          _
        // Predicated region
        $region17: #{tpu_custom_call.1} parent=11 // pred_check
          %p139 = pneg %p84
        $region18: #{tpu_custom_call.1} parent=11 // pred_check_branch
          %141 = sbr.rel (%p139) target = $region20
        $region19: #{tpu_custom_call.1} parent=11 // pred_region
          %143 = vsyncadd [#allocation8], 0
          %s145 = sshll.u32 %s2, 4
          %s146 = int_to_ptr.hbm [resolvable:$true] %s145
          %s147 = sshll.u32 [#allocation9], 4
          %s148 = int_to_ptr.vmem [resolvable:$true] %s147
          %150 = dma.hbm_to_vmem [thread:$0]  %s146, 128, %s148, [#allocation8]
        $region20: #{tpu_custom_call.1} parent=11 // pred_fallthru
          _
      $region12: #{tpu_custom_call.1} parent=5 // pred_fallthru
        _
      %p151 = scmp.lt.s32.totalorder %s16, 2
      // Predicated region
      $region21: #{tpu_custom_call.1} parent=5 // pred_check
        %p152 = pneg %p151
      $region22: #{tpu_custom_call.1} parent=5 // pred_check_branch
        %154 = sbr.rel (%p152) target = $region24
      $region23: #{tpu_custom_call.1} parent=5 // pred_region
        // Predicated region
        $region25: #{tpu_custom_call.1} parent=23 // pred_check
          %p155 = pneg %p36
        $region26: #{tpu_custom_call.1} parent=23 // pred_check_branch
          %157 = sbr.rel (%p155) target = $region28
        $region27: #{tpu_custom_call.1} parent=23 // pred_region
          %s158 = sand.u32 %s26, 1
          %s159 = scalar_lea.sflag [#allocation5], %s158
          %s160 = sand.u32 %s26, 1
          %s161 = smul.addr %s160, 24
          %s162 = scalar_lea.vmem [#allocation4], %s161
          %s163 = smul.u32 3, %s16
          %165 = vsyncadd %s159, 0
          %s166 = smul.addr %s163, 8
          %s167 = scalar_lea.hbm %s0, %s166
          %s168 = sshll.u32 %s167, 4
          %s169 = int_to_ptr.hbm [resolvable:$true] %s168
          %s170 = sshll.u32 %s162, 4
          %s171 = int_to_ptr.vmem [resolvable:$true] %s170
          %176 = dma.hbm_to_vmem [thread:$0]  %s169, 384, %s171, %s159, 128, 128, 8
        $region28: #{tpu_custom_call.1} parent=23 // pred_fallthru
          _
      $region24: #{tpu_custom_call.1} parent=5 // pred_fallthru
        _
      %p177 = scmp.le.s32.totalorder 1, %s16
      %p178 = scmp.lt.s32.totalorder %s16, 3
      %p179 = pnand %p177, %p178
      %p180 = pneg %p179
      // Predicated region
      $region29: #{tpu_custom_call.1} parent=5 // pred_check
        _
      $region30: #{tpu_custom_call.1} parent=5 // pred_check_branch
        %182 = sbr.rel (%p179) target = $region32
      $region31: #{tpu_custom_call.1} parent=5 // pred_region
        %s183 = ssub.s32 %s16, 1
        %s184 = sand.u32 %s29, 1
        %s185 = scalar_lea.sflag [#allocation5], %s184
        %s186 = sand.u32 %s29, 1
        %s187 = smul.addr %s186, 24
        %s188 = scalar_lea.vmem [#allocation4], %s187
        // Predicated region
        $region33: #{tpu_custom_call.1} parent=31 // pred_check
          %p189 = pneg %p42
        $region34: #{tpu_custom_call.1} parent=31 // pred_check_branch
          %191 = sbr.rel (%p189) target = $region36
        $region35: #{tpu_custom_call.1} parent=31 // pred_region
          %193 = dma.done %s185, 384
        $region36: #{tpu_custom_call.1} parent=31 // pred_fallthru
          _
        // Predicated region
        $region37: #{tpu_custom_call.1} parent=31 // pred_check
          %p194 = pneg %p63
        $region38: #{tpu_custom_call.1} parent=31 // pred_check_branch
          %196 = sbr.rel (%p194) target = $region40
        $region39: #{tpu_custom_call.1} parent=31 // pred_region
          %198 = dma.done [#allocation8], 11264
        $region40: #{tpu_custom_call.1} parent=31 // pred_fallthru
          _
        // Predicated region
        $region41: #{tpu_custom_call.1} parent=31 // pred_check
          %p199 = pneg %p84
        $region42: #{tpu_custom_call.1} parent=31 // pred_check_branch
          %201 = sbr.rel (%p199) target = $region44
        $region43: #{tpu_custom_call.1} parent=31 // pred_region
          %203 = dma.done [#allocation8], 128
        $region44: #{tpu_custom_call.1} parent=31 // pred_fallthru
          _
        %s204 = sand.u32 %s29, 1
        %s205 = scalar_lea.sflag [#allocation5], %s204
        %s206 = sand.u32 %s29, 1
        %s207 = smul.addr %s206, 24
        %s208 = scalar_lea.vmem [#allocation4], %s207
        %p209 = pneg %p42
        %p210 = pneg %p39
        %p211 = pneg %p63
        %p212 = pneg %p60
        %p213 = pneg %p84
        %p214 = pneg %p81
        %p215 = pneg %p110
        %p216 = pneg %p107
        %s217 = sand.u32 %s97, 1
        %s218 = scalar_lea.sflag [#allocation6], %s217
        %s219 = sand.u32 %s97, 1
        %s220 = smul.addr %s219, 8
        %s221 = scalar_lea.vmem [#allocation10], %s220
        %s222 = smul.u32 3, %s21
        %v223 = vld [vmem:[%s188] sm:$0xff]
        %v224 = vld [vmem:[%s188 + $0x8] sm:$0xff]
        %v225 = vld [vmem:[%s188 + $0x10] sm:$0xff]
        %226 = vst [vmem:[#allocation2] sm:$0xff] %v223
        %227 = vst [vmem:[#allocation2 + $0x8] sm:$0xff] %v224
        %228 = vst [vmem:[#allocation2 + $0x10] sm:$0xff] %v225
        %229 = vst [vmem:[#allocation3] sm:$0xff] 0.0
        %v230 = vld [vmem:[#allocation2 + $0x7] sm:$0xff]
        %v231 = vld [vmem:[#allocation2 + $0xf] sm:$0xff]
        %v232 = vpack.c.bf16 %v231, %v230
        %v233 = vld [vmem:[#allocation7] sm:$0xf]
        %v234 = vld [vmem:[#allocation7 + $0x4] sm:$0xf]
        %v235 = vld [vmem:[#allocation7 + $0x8] sm:$0xf]
        %v236 = vld [vmem:[#allocation7 + $0xc] sm:$0xf]
        %v237 = vld [vmem:[#allocation7 + $0x10] sm:$0xf]
        %v238 = vld [vmem:[#allocation7 + $0x14] sm:$0xf]
        %v239 = vld [vmem:[#allocation7 + $0x18] sm:$0xf]
        %v240 = vld [vmem:[#allocation7 + $0x1c] sm:$0xf]
        %v241 = vld [vmem:[#allocation7 + $0x20] sm:$0xf]
        %v242 = vld [vmem:[#allocation7 + $0x24] sm:$0xf]
        %v243 = vld [vmem:[#allocation7 + $0x28] sm:$0xf]
        %v244 = vld [vmem:[#allocation7 + $0x2c] sm:$0xf]
        %v245 = vld [vmem:[#allocation7 + $0x30] sm:$0xf]
        %v246 = vld [vmem:[#allocation7 + $0x34] sm:$0xf]
        %v247 = vld [vmem:[#allocation7 + $0x38] sm:$0xf]
        %v248 = vld [vmem:[#allocation7 + $0x3c] sm:$0xf]
        %v249 = vld [vmem:[#allocation2 + $0x8] sm:$0xff]
        %v250 = vld [vmem:[#allocation2 + $0x10] sm:$0xff]
        %v251 = vpack.c.bf16 %v250, %v249
        %v252 = vld [vmem:[#allocation7 + $0x40] sm:$0xf]
        %v253 = vld [vmem:[#allocation7 + $0x44] sm:$0xf]
        %v254 = vld [vmem:[#allocation7 + $0x48] sm:$0xf]
        %v255 = vld [vmem:[#allocation7 + $0x4c] sm:$0xf]
        %v256 = vld [vmem:[#allocation7 + $0x50] sm:$0xf]
        %v257 = vld [vmem:[#allocation7 + $0x54] sm:$0xf]
        %v258 = vld [vmem:[#allocation7 + $0x58] sm:$0xf]
        %v259 = vld [vmem:[#allocation7 + $0x5c] sm:$0xf]
        %v260 = vld [vmem:[#allocation7 + $0x60] sm:$0xf]
        %v261 = vld [vmem:[#allocation7 + $0x64] sm:$0xf]
        %v262 = vld [vmem:[#allocation7 + $0x68] sm:$0xf]
        %v263 = vld [vmem:[#allocation7 + $0x6c] sm:$0xf]
        %v264 = vld [vmem:[#allocation7 + $0x70] sm:$0xf]
        %v265 = vld [vmem:[#allocation7 + $0x74] sm:$0xf]
        %v266 = vld [vmem:[#allocation7 + $0x78] sm:$0xf]
        %v267 = vld [vmem:[#allocation7 + $0x7c] sm:$0xf]
        %v284 = vunpack.c.l.b16 %v252
        %v285 = vunpack.c.l.b16 %v253
        %v286 = vunpack.c.l.b16 %v254
        %v287 = vunpack.c.l.b16 %v255
        %v288 = vunpack.c.l.b16 %v256
        %v289 = vunpack.c.l.b16 %v257
        %v290 = vunpack.c.l.b16 %v258
        %v291 = vunpack.c.l.b16 %v259
        %v292 = vunpack.c.l.b16 %v260
        %v293 = vunpack.c.l.b16 %v261
        %v294 = vunpack.c.l.b16 %v262
        %v295 = vunpack.c.l.b16 %v263
        %v296 = vunpack.c.l.b16 %v264
        %v297 = vunpack.c.l.b16 %v265
        %v298 = vunpack.c.l.b16 %v266
        %v299 = vunpack.c.l.b16 %v267
        %v300 = vpack.c.b16 %v285, %v284
        %v301 = vpack.c.b16 %v287, %v286
        %v302 = vpack.c.b16 %v289, %v288
        %v303 = vpack.c.b16 %v291, %v290
        %v304 = vpack.c.b16 %v293, %v292
        %v305 = vpack.c.b16 %v295, %v294
        %v306 = vpack.c.b16 %v297, %v296
        %v307 = vpack.c.b16 %v299, %v298
        %316 = vmatpush.bf16.msra.mxu0 %v307
        %317 = vmatpush.bf16.msra.mxu0 %v306
        %318 = vmatpush.bf16.msra.mxu0 %v305
        %319 = vmatpush.bf16.msra.mxu0 %v304
        %320 = vmatpush.bf16.msra.mxu0 %v303
        %321 = vmatpush.bf16.msra.mxu0 %v302
        %322 = vmatpush.bf16.msra.mxu0 %v301
        %323 = vmatpush.bf16.msra.mxu0 %v300
        %324 = vmatmul.bf16.gmra.mxu0 %v251
        %v325 = vpop.f32.mrf.mxu0
        %v326 = vadd.f32 0.0, %v325
        %v327 = vpop.f32.mrf.mxu0
        %v328 = vadd.f32 0.0, %v327
        %329 = vdwg.mxu0
        %v346 = vunpack.c.l.b16 %v233
        %v347 = vunpack.c.l.b16 %v234
        %v348 = vunpack.c.l.b16 %v235
        %v349 = vunpack.c.l.b16 %v236
        %v350 = vunpack.c.l.b16 %v237
        %v351 = vunpack.c.l.b16 %v238
        %v352 = vunpack.c.l.b16 %v239
        %v353 = vunpack.c.l.b16 %v240
        %v354 = vunpack.c.l.b16 %v241
        %v355 = vunpack.c.l.b16 %v242
        %v356 = vunpack.c.l.b16 %v243
        %v357 = vunpack.c.l.b16 %v244
        %v358 = vunpack.c.l.b16 %v245
        %v359 = vunpack.c.l.b16 %v246
        %v360 = vunpack.c.l.b16 %v247
        %v361 = vunpack.c.l.b16 %v248
        %v362 = vpack.c.b16 %v347, %v346
        %v363 = vpack.c.b16 %v349, %v348
        %v364 = vpack.c.b16 %v351, %v350
        %v365 = vpack.c.b16 %v353, %v352
        %v366 = vpack.c.b16 %v355, %v354
        %v367 = vpack.c.b16 %v357, %v356
        %v368 = vpack.c.b16 %v359, %v358
        %v369 = vpack.c.b16 %v361, %v360
        %378 = vmatpush.bf16.msra.mxu0 %v369
        %379 = vmatpush.bf16.msra.mxu0 %v368
        %380 = vmatpush.bf16.msra.mxu0 %v367
        %381 = vmatpush.bf16.msra.mxu0 %v366
        %382 = vmatpush.bf16.msra.mxu0 %v365
        %383 = vmatpush.bf16.msra.mxu0 %v364
        %384 = vmatpush.bf16.msra.mxu0 %v363
        %385 = vmatpush.bf16.msra.mxu0 %v362
        %386 = vmatmul.bf16.gmra.mxu0 %v232
        %v387 = vpop.f32.mrf.mxu0
        %v388 = vadd.f32 %v326, %v387
        %v389 = vpop.f32.mrf.mxu0
        %v390 = vadd.f32 %v328, %v389
        %391 = vdwg.mxu0
        %v392 = vld [vmem:[#allocation9] sm:$0x1]
        %v393 = vperm.slane %v392, 0
        %v394 = vadd.f32 %v388, %v393
        %v395 = vadd.f32 %v390, %v393
        %v396 = vmax.f32 %v394, 0.0
        %v397 = vmax.f32 %v395, 0.0
        %398 = vst [vmem:[#allocation3 + $0x8] sm:$0xff] %v396
        %399 = vst [vmem:[#allocation3 + $0x10] sm:$0xff] %v397
        %v400 = vld [vmem:[#allocation3 + $0x7] sm:$0xff]
        %v401 = vld [vmem:[#allocation3 + $0xf] sm:$0xff]
        %v402 = vpack.c.bf16 %v401, %v400
        %v403 = vld [vmem:[#allocation7 + $0x100] sm:$0xf]
        %v404 = vld [vmem:[#allocation7 + $0x104] sm:$0xf]
        %v405 = vld [vmem:[#allocation7 + $0x108] sm:$0xf]
        %v406 = vld [vmem:[#allocation7 + $0x10c] sm:$0xf]
        %v407 = vld [vmem:[#allocation7 + $0x110] sm:$0xf]
        %v408 = vld [vmem:[#allocation7 + $0x114] sm:$0xf]
        %v409 = vld [vmem:[#allocation7 + $0x118] sm:$0xf]
        %v410 = vld [vmem:[#allocation7 + $0x11c] sm:$0xf]
        %v411 = vld [vmem:[#allocation7 + $0x120] sm:$0xf]
        %v412 = vld [vmem:[#allocation7 + $0x124] sm:$0xf]
        %v413 = vld [vmem:[#allocation7 + $0x128] sm:$0xf]
        %v414 = vld [vmem:[#allocation7 + $0x12c] sm:$0xf]
        %v415 = vld [vmem:[#allocation7 + $0x130] sm:$0xf]
        %v416 = vld [vmem:[#allocation7 + $0x134] sm:$0xf]
        %v417 = vld [vmem:[#allocation7 + $0x138] sm:$0xf]
        %v418 = vld [vmem:[#allocation7 + $0x13c] sm:$0xf]
        %v419 = vld [vmem:[#allocation3 + $0x8] sm:$0xff]
        %v420 = vld [vmem:[#allocation3 + $0x10] sm:$0xff]
        %v421 = vpack.c.bf16 %v420, %v419
        %v422 = vld [vmem:[#allocation7 + $0x140] sm:$0xf]
        %v423 = vld [vmem:[#allocation7 + $0x144] sm:$0xf]
        %v424 = vld [vmem:[#allocation7 + $0x148] sm:$0xf]
        %v425 = vld [vmem:[#allocation7 + $0x14c] sm:$0xf]
        %v426 = vld [vmem:[#allocation7 + $0x150] sm:$0xf]
        %v427 = vld [vmem:[#allocation7 + $0x154] sm:$0xf]
        %v428 = vld [vmem:[#allocation7 + $0x158] sm:$0xf]
        %v429 = vld [vmem:[#allocation7 + $0x15c] sm:$0xf]
        %v430 = vld [vmem:[#allocation7 + $0x160] sm:$0xf]
        %v431 = vld [vmem:[#allocation7 + $0x164] sm:$0xf]
        %v432 = vld [vmem:[#allocation7 + $0x168] sm:$0xf]
        %v433 = vld [vmem:[#allocation7 + $0x16c] sm:$0xf]
        %v434 = vld [vmem:[#allocation7 + $0x170] sm:$0xf]
        %v435 = vld [vmem:[#allocation7 + $0x174] sm:$0xf]
        %v436 = vld [vmem:[#allocation7 + $0x178] sm:$0xf]
        %v437 = vld [vmem:[#allocation7 + $0x17c] sm:$0xf]
        %v454 = vunpack.c.l.b16 %v422
        %v455 = vunpack.c.l.b16 %v423
        %v456 = vunpack.c.l.b16 %v424
        %v457 = vunpack.c.l.b16 %v425
        %v458 = vunpack.c.l.b16 %v426
        %v459 = vunpack.c.l.b16 %v427
        %v460 = vunpack.c.l.b16 %v428
        %v461 = vunpack.c.l.b16 %v429
        %v462 = vunpack.c.l.b16 %v430
        %v463 = vunpack.c.l.b16 %v431
        %v464 = vunpack.c.l.b16 %v432
        %v465 = vunpack.c.l.b16 %v433
        %v466 = vunpack.c.l.b16 %v434
        %v467 = vunpack.c.l.b16 %v435
        %v468 = vunpack.c.l.b16 %v436
        %v469 = vunpack.c.l.b16 %v437
        %v470 = vpack.c.b16 %v455, %v454
        %v471 = vpack.c.b16 %v457, %v456
        %v472 = vpack.c.b16 %v459, %v458
        %v473 = vpack.c.b16 %v461, %v460
        %v474 = vpack.c.b16 %v463, %v462
        %v475 = vpack.c.b16 %v465, %v464
        %v476 = vpack.c.b16 %v467, %v466
        %v477 = vpack.c.b16 %v469, %v468
        %486 = vmatpush.bf16.msra.mxu0 %v477
        %487 = vmatpush.bf16.msra.mxu0 %v476
        %488 = vmatpush.bf16.msra.mxu0 %v475
        %489 = vmatpush.bf16.msra.mxu0 %v474
        %490 = vmatpush.bf16.msra.mxu0 %v473
        %491 = vmatpush.bf16.msra.mxu0 %v472
        %492 = vmatpush.bf16.msra.mxu0 %v471
        %493 = vmatpush.bf16.msra.mxu0 %v470
        %494 = vmatmul.bf16.gmra.mxu0 %v421
        %v495 = vpop.f32.mrf.mxu0
        %v496 = vadd.f32 0.0, %v495
        %v497 = vpop.f32.mrf.mxu0
        %v498 = vadd.f32 0.0, %v497
        %499 = vdwg.mxu0
        %v516 = vunpack.c.l.b16 %v403
        %v517 = vunpack.c.l.b16 %v404
        %v518 = vunpack.c.l.b16 %v405
        %v519 = vunpack.c.l.b16 %v406
        %v520 = vunpack.c.l.b16 %v407
        %v521 = vunpack.c.l.b16 %v408
        %v522 = vunpack.c.l.b16 %v409
        %v523 = vunpack.c.l.b16 %v410
        %v524 = vunpack.c.l.b16 %v411
        %v525 = vunpack.c.l.b16 %v412
        %v526 = vunpack.c.l.b16 %v413
        %v527 = vunpack.c.l.b16 %v414
        %v528 = vunpack.c.l.b16 %v415
        %v529 = vunpack.c.l.b16 %v416
        %v530 = vunpack.c.l.b16 %v417
        %v531 = vunpack.c.l.b16 %v418
        %v532 = vpack.c.b16 %v517, %v516
        %v533 = vpack.c.b16 %v519, %v518
        %v534 = vpack.c.b16 %v521, %v520
        %v535 = vpack.c.b16 %v523, %v522
        %v536 = vpack.c.b16 %v525, %v524
        %v537 = vpack.c.b16 %v527, %v526
        %v538 = vpack.c.b16 %v529, %v528
        %v539 = vpack.c.b16 %v531, %v530
        %548 = vmatpush.bf16.msra.mxu0 %v539
        %549 = vmatpush.bf16.msra.mxu0 %v538
        %550 = vmatpush.bf16.msra.mxu0 %v537
        %551 = vmatpush.bf16.msra.mxu0 %v536
        %552 = vmatpush.bf16.msra.mxu0 %v535
        %553 = vmatpush.bf16.msra.mxu0 %v534
        %554 = vmatpush.bf16.msra.mxu0 %v533
        %555 = vmatpush.bf16.msra.mxu0 %v532
        %556 = vmatmul.bf16.gmra.mxu0 %v402
        %v557 = vpop.f32.mrf.mxu0
        %v558 = vadd.f32 %v496, %v557
        %v559 = vpop.f32.mrf.mxu0
        %v560 = vadd.f32 %v498, %v559
        %561 = vdwg.mxu0
        %v562 = vld [vmem:[#allocation9 + $0x2] sm:$0x1]
        %v563 = vperm.slane %v562, 0
        %v564 = vadd.f32 %v558, %v563
        %v565 = vadd.f32 %v560, %v563
        %v566 = vmax.f32 %v564, 0.0
        %v567 = vmax.f32 %v565, 0.0
        %v568 = vld [vmem:[#allocation2 + $0x8] sm:$0xff]
        %v569 = vld [vmem:[#allocation2 + $0x10] sm:$0xff]
        %v570 = vld [vmem:[#allocation7 + $0x200] sm:$0xf]
        %v571 = vld [vmem:[#allocation7 + $0x204] sm:$0xf]
        %v572 = vld [vmem:[#allocation7 + $0x208] sm:$0xf]
        %v573 = vld [vmem:[#allocation7 + $0x20c] sm:$0xf]
        %v574 = vld [vmem:[#allocation7 + $0x210] sm:$0xf]
        %v575 = vld [vmem:[#allocation7 + $0x214] sm:$0xf]
        %v576 = vld [vmem:[#allocation7 + $0x218] sm:$0xf]
        %v577 = vld [vmem:[#allocation7 + $0x21c] sm:$0xf]
        %v578 = vld [vmem:[#allocation7 + $0x220] sm:$0xf]
        %v579 = vld [vmem:[#allocation7 + $0x224] sm:$0xf]
        %v580 = vld [vmem:[#allocation7 + $0x228] sm:$0xf]
        %v581 = vld [vmem:[#allocation7 + $0x22c] sm:$0xf]
        %v582 = vld [vmem:[#allocation7 + $0x230] sm:$0xf]
        %v583 = vld [vmem:[#allocation7 + $0x234] sm:$0xf]
        %v584 = vld [vmem:[#allocation7 + $0x238] sm:$0xf]
        %v585 = vld [vmem:[#allocation7 + $0x23c] sm:$0xf]
        %v586 = vpack.c.bf16 %v569, %v568
        %v587 = vld [vmem:[#allocation9 + $0x4] sm:$0x1]
        %v588 = vperm.slane %v587, 0
        %v605 = vunpack.c.l.b16 %v570
        %v606 = vunpack.c.l.b16 %v571
        %v607 = vunpack.c.l.b16 %v572
        %v608 = vunpack.c.l.b16 %v573
        %v609 = vunpack.c.l.b16 %v574
        %v610 = vunpack.c.l.b16 %v575
        %v611 = vunpack.c.l.b16 %v576
        %v612 = vunpack.c.l.b16 %v577
        %v613 = vunpack.c.l.b16 %v578
        %v614 = vunpack.c.l.b16 %v579
        %v615 = vunpack.c.l.b16 %v580
        %v616 = vunpack.c.l.b16 %v581
        %v617 = vunpack.c.l.b16 %v582
        %v618 = vunpack.c.l.b16 %v583
        %v619 = vunpack.c.l.b16 %v584
        %v620 = vunpack.c.l.b16 %v585
        %v621 = vpack.c.b16 %v606, %v605
        %v622 = vpack.c.b16 %v608, %v607
        %v623 = vpack.c.b16 %v610, %v609
        %v624 = vpack.c.b16 %v612, %v611
        %v625 = vpack.c.b16 %v614, %v613
        %v626 = vpack.c.b16 %v616, %v615
        %v627 = vpack.c.b16 %v618, %v617
        %v628 = vpack.c.b16 %v620, %v619
        %637 = vmatpush.bf16.msra.mxu0 %v628
        %638 = vmatpush.bf16.msra.mxu0 %v627
        %639 = vmatpush.bf16.msra.mxu0 %v626
        %640 = vmatpush.bf16.msra.mxu0 %v625
        %641 = vmatpush.bf16.msra.mxu0 %v624
        %642 = vmatpush.bf16.msra.mxu0 %v623
        %643 = vmatpush.bf16.msra.mxu0 %v622
        %644 = vmatpush.bf16.msra.mxu0 %v621
        %645 = vmatmul.bf16.gmra.mxu0 %v586
        %v646 = vpop.f32.mrf.mxu0
        %v647 = vadd.f32 %v588, %v646
        %v648 = vpop.f32.mrf.mxu0
        %v649 = vadd.f32 %v588, %v648
        %650 = vdwg.mxu0
        %v651 = vadd.f32 %v566, %v647
        %v652 = vadd.f32 %v567, %v649
        %v653 = vmax.f32 %v651, 0.0
        %v654 = vmax.f32 %v652, 0.0
        %655 = vst [vmem:[#allocation2 + $0x8] sm:$0xff] %v653
        %656 = vst [vmem:[#allocation2 + $0x10] sm:$0xff] %v654
        %v657 = vld [vmem:[#allocation2 + $0x6] sm:$0xff]
        %v658 = vld [vmem:[#allocation2 + $0xe] sm:$0xff]
        %v659 = vpack.c.bf16 %v658, %v657
        %v660 = vld [vmem:[#allocation7 + $0x80] sm:$0xf]
        %v661 = vld [vmem:[#allocation7 + $0x84] sm:$0xf]
        %v662 = vld [vmem:[#allocation7 + $0x88] sm:$0xf]
        %v663 = vld [vmem:[#allocation7 + $0x8c] sm:$0xf]
        %v664 = vld [vmem:[#allocation7 + $0x90] sm:$0xf]
        %v665 = vld [vmem:[#allocation7 + $0x94] sm:$0xf]
        %v666 = vld [vmem:[#allocation7 + $0x98] sm:$0xf]
        %v667 = vld [vmem:[#allocation7 + $0x9c] sm:$0xf]
        %v668 = vld [vmem:[#allocation7 + $0xa0] sm:$0xf]
        %v669 = vld [vmem:[#allocation7 + $0xa4] sm:$0xf]
        %v670 = vld [vmem:[#allocation7 + $0xa8] sm:$0xf]
        %v671 = vld [vmem:[#allocation7 + $0xac] sm:$0xf]
        %v672 = vld [vmem:[#allocation7 + $0xb0] sm:$0xf]
        %v673 = vld [vmem:[#allocation7 + $0xb4] sm:$0xf]
        %v674 = vld [vmem:[#allocation7 + $0xb8] sm:$0xf]
        %v675 = vld [vmem:[#allocation7 + $0xbc] sm:$0xf]
        %v676 = vld [vmem:[#allocation2 + $0x8] sm:$0xff]
        %v677 = vld [vmem:[#allocation2 + $0x10] sm:$0xff]
        %v678 = vpack.c.bf16 %v677, %v676
        %v679 = vld [vmem:[#allocation7 + $0xc0] sm:$0xf]
        %v680 = vld [vmem:[#allocation7 + $0xc4] sm:$0xf]
        %v681 = vld [vmem:[#allocation7 + $0xc8] sm:$0xf]
        %v682 = vld [vmem:[#allocation7 + $0xcc] sm:$0xf]
        %v683 = vld [vmem:[#allocation7 + $0xd0] sm:$0xf]
        %v684 = vld [vmem:[#allocation7 + $0xd4] sm:$0xf]
        %v685 = vld [vmem:[#allocation7 + $0xd8] sm:$0xf]
        %v686 = vld [vmem:[#allocation7 + $0xdc] sm:$0xf]
        %v687 = vld [vmem:[#allocation7 + $0xe0] sm:$0xf]
        %v688 = vld [vmem:[#allocation7 + $0xe4] sm:$0xf]
        %v689 = vld [vmem:[#allocation7 + $0xe8] sm:$0xf]
        %v690 = vld [vmem:[#allocation7 + $0xec] sm:$0xf]
        %v691 = vld [vmem:[#allocation7 + $0xf0] sm:$0xf]
        %v692 = vld [vmem:[#allocation7 + $0xf4] sm:$0xf]
        %v693 = vld [vmem:[#allocation7 + $0xf8] sm:$0xf]
        %v694 = vld [vmem:[#allocation7 + $0xfc] sm:$0xf]
        %v711 = vunpack.c.l.b16 %v679
        %v712 = vunpack.c.l.b16 %v680
        %v713 = vunpack.c.l.b16 %v681
        %v714 = vunpack.c.l.b16 %v682
        %v715 = vunpack.c.l.b16 %v683
        %v716 = vunpack.c.l.b16 %v684
        %v717 = vunpack.c.l.b16 %v685
        %v718 = vunpack.c.l.b16 %v686
        %v719 = vunpack.c.l.b16 %v687
        %v720 = vunpack.c.l.b16 %v688
        %v721 = vunpack.c.l.b16 %v689
        %v722 = vunpack.c.l.b16 %v690
        %v723 = vunpack.c.l.b16 %v691
        %v724 = vunpack.c.l.b16 %v692
        %v725 = vunpack.c.l.b16 %v693
        %v726 = vunpack.c.l.b16 %v694
        %v727 = vpack.c.b16 %v712, %v711
        %v728 = vpack.c.b16 %v714, %v713
        %v729 = vpack.c.b16 %v716, %v715
        %v730 = vpack.c.b16 %v718, %v717
        %v731 = vpack.c.b16 %v720, %v719
        %v732 = vpack.c.b16 %v722, %v721
        %v733 = vpack.c.b16 %v724, %v723
        %v734 = vpack.c.b16 %v726, %v725
        %743 = vmatpush.bf16.msra.mxu0 %v734
        %744 = vmatpush.bf16.msra.mxu0 %v733
        %745 = vmatpush.bf16.msra.mxu0 %v732
        %746 = vmatpush.bf16.msra.mxu0 %v731
        %747 = vmatpush.bf16.msra.mxu0 %v730
        %748 = vmatpush.bf16.msra.mxu0 %v729
        %749 = vmatpush.bf16.msra.mxu0 %v728
        %750 = vmatpush.bf16.msra.mxu0 %v727
        %751 = vmatmul.bf16.gmra.mxu0 %v678
        %v752 = vpop.f32.mrf.mxu0
        %v753 = vadd.f32 0.0, %v752
        %v754 = vpop.f32.mrf.mxu0
        %v755 = vadd.f32 0.0, %v754
        %756 = vdwg.mxu0
        %v773 = vunpack.c.l.b16 %v660
        %v774 = vunpack.c.l.b16 %v661
        %v775 = vunpack.c.l.b16 %v662
        %v776 = vunpack.c.l.b16 %v663
        %v777 = vunpack.c.l.b16 %v664
        %v778 = vunpack.c.l.b16 %v665
        %v779 = vunpack.c.l.b16 %v666
        %v780 = vunpack.c.l.b16 %v667
        %v781 = vunpack.c.l.b16 %v668
        %v782 = vunpack.c.l.b16 %v669
        %v783 = vunpack.c.l.b16 %v670
        %v784 = vunpack.c.l.b16 %v671
        %v785 = vunpack.c.l.b16 %v672
        %v786 = vunpack.c.l.b16 %v673
        %v787 = vunpack.c.l.b16 %v674
        %v788 = vunpack.c.l.b16 %v675
        %v789 = vpack.c.b16 %v774, %v773
        %v790 = vpack.c.b16 %v776, %v775
        %v791 = vpack.c.b16 %v778, %v777
        %v792 = vpack.c.b16 %v780, %v779
        %v793 = vpack.c.b16 %v782, %v781
        %v794 = vpack.c.b16 %v784, %v783
        %v795 = vpack.c.b16 %v786, %v785
        %v796 = vpack.c.b16 %v788, %v787
        %805 = vmatpush.bf16.msra.mxu0 %v796
        %806 = vmatpush.bf16.msra.mxu0 %v795
        %807 = vmatpush.bf16.msra.mxu0 %v794
        %808 = vmatpush.bf16.msra.mxu0 %v793
        %809 = vmatpush.bf16.msra.mxu0 %v792
        %810 = vmatpush.bf16.msra.mxu0 %v791
        %811 = vmatpush.bf16.msra.mxu0 %v790
        %812 = vmatpush.bf16.msra.mxu0 %v789
        %813 = vmatmul.bf16.gmra.mxu0 %v659
        %v814 = vpop.f32.mrf.mxu0
        %v815 = vadd.f32 %v753, %v814
        %v816 = vpop.f32.mrf.mxu0
        %v817 = vadd.f32 %v755, %v816
        %818 = vdwg.mxu0
        %v819 = vld [vmem:[#allocation9 + $0x1] sm:$0x1]
        %v820 = vperm.slane %v819, 0
        %v821 = vadd.f32 %v815, %v820
        %v822 = vadd.f32 %v817, %v820
        %v823 = vmax.f32 %v821, 0.0
        %v824 = vmax.f32 %v822, 0.0
        %825 = vst [vmem:[#allocation3 + $0x8] sm:$0xff] %v823
        %826 = vst [vmem:[#allocation3 + $0x10] sm:$0xff] %v824
        %v827 = vld [vmem:[#allocation3 + $0x6] sm:$0xff]
        %v828 = vld [vmem:[#allocation3 + $0xe] sm:$0xff]
        %v829 = vpack.c.bf16 %v828, %v827
        %v830 = vld [vmem:[#allocation7 + $0x180] sm:$0xf]
        %v831 = vld [vmem:[#allocation7 + $0x184] sm:$0xf]
        %v832 = vld [vmem:[#allocation7 + $0x188] sm:$0xf]
        %v833 = vld [vmem:[#allocation7 + $0x18c] sm:$0xf]
        %v834 = vld [vmem:[#allocation7 + $0x190] sm:$0xf]
        %v835 = vld [vmem:[#allocation7 + $0x194] sm:$0xf]
        %v836 = vld [vmem:[#allocation7 + $0x198] sm:$0xf]
        %v837 = vld [vmem:[#allocation7 + $0x19c] sm:$0xf]
        %v838 = vld [vmem:[#allocation7 + $0x1a0] sm:$0xf]
        %v839 = vld [vmem:[#allocation7 + $0x1a4] sm:$0xf]
        %v840 = vld [vmem:[#allocation7 + $0x1a8] sm:$0xf]
        %v841 = vld [vmem:[#allocation7 + $0x1ac] sm:$0xf]
        %v842 = vld [vmem:[#allocation7 + $0x1b0] sm:$0xf]
        %v843 = vld [vmem:[#allocation7 + $0x1b4] sm:$0xf]
        %v844 = vld [vmem:[#allocation7 + $0x1b8] sm:$0xf]
        %v845 = vld [vmem:[#allocation7 + $0x1bc] sm:$0xf]
        %v846 = vld [vmem:[#allocation3 + $0x8] sm:$0xff]
        %v847 = vld [vmem:[#allocation3 + $0x10] sm:$0xff]
        %v848 = vpack.c.bf16 %v847, %v846
        %v849 = vld [vmem:[#allocation7 + $0x1c0] sm:$0xf]
        %v850 = vld [vmem:[#allocation7 + $0x1c4] sm:$0xf]
        %v851 = vld [vmem:[#allocation7 + $0x1c8] sm:$0xf]
        %v852 = vld [vmem:[#allocation7 + $0x1cc] sm:$0xf]
        %v853 = vld [vmem:[#allocation7 + $0x1d0] sm:$0xf]
        %v854 = vld [vmem:[#allocation7 + $0x1d4] sm:$0xf]
        %v855 = vld [vmem:[#allocation7 + $0x1d8] sm:$0xf]
        %v856 = vld [vmem:[#allocation7 + $0x1dc] sm:$0xf]
        %v857 = vld [vmem:[#allocation7 + $0x1e0] sm:$0xf]
        %v858 = vld [vmem:[#allocation7 + $0x1e4] sm:$0xf]
        %v859 = vld [vmem:[#allocation7 + $0x1e8] sm:$0xf]
        %v860 = vld [vmem:[#allocation7 + $0x1ec] sm:$0xf]
        %v861 = vld [vmem:[#allocation7 + $0x1f0] sm:$0xf]
        %v862 = vld [vmem:[#allocation7 + $0x1f4] sm:$0xf]
        %v863 = vld [vmem:[#allocation7 + $0x1f8] sm:$0xf]
        %v864 = vld [vmem:[#allocation7 + $0x1fc] sm:$0xf]
        %v881 = vunpack.c.l.b16 %v849
        %v882 = vunpack.c.l.b16 %v850
        %v883 = vunpack.c.l.b16 %v851
        %v884 = vunpack.c.l.b16 %v852
        %v885 = vunpack.c.l.b16 %v853
        %v886 = vunpack.c.l.b16 %v854
        %v887 = vunpack.c.l.b16 %v855
        %v888 = vunpack.c.l.b16 %v856
        %v889 = vunpack.c.l.b16 %v857
        %v890 = vunpack.c.l.b16 %v858
        %v891 = vunpack.c.l.b16 %v859
        %v892 = vunpack.c.l.b16 %v860
        %v893 = vunpack.c.l.b16 %v861
        %v894 = vunpack.c.l.b16 %v862
        %v895 = vunpack.c.l.b16 %v863
        %v896 = vunpack.c.l.b16 %v864
        %v897 = vpack.c.b16 %v882, %v881
        %v898 = vpack.c.b16 %v884, %v883
        %v899 = vpack.c.b16 %v886, %v885
        %v900 = vpack.c.b16 %v888, %v887
        %v901 = vpack.c.b16 %v890, %v889
        %v902 = vpack.c.b16 %v892, %v891
        %v903 = vpack.c.b16 %v894, %v893
        %v904 = vpack.c.b16 %v896, %v895
        %913 = vmatpush.bf16.msra.mxu0 %v904
        %914 = vmatpush.bf16.msra.mxu0 %v903
        %915 = vmatpush.bf16.msra.mxu0 %v902
        %916 = vmatpush.bf16.msra.mxu0 %v901
        %917 = vmatpush.bf16.msra.mxu0 %v900
        %918 = vmatpush.bf16.msra.mxu0 %v899
        %919 = vmatpush.bf16.msra.mxu0 %v898
        %920 = vmatpush.bf16.msra.mxu0 %v897
        %921 = vmatmul.bf16.gmra.mxu0 %v848
        %v922 = vpop.f32.mrf.mxu0
        %v923 = vadd.f32 0.0, %v922
        %v924 = vpop.f32.mrf.mxu0
        %v925 = vadd.f32 0.0, %v924
        %926 = vdwg.mxu0
        %v943 = vunpack.c.l.b16 %v830
        %v944 = vunpack.c.l.b16 %v831
        %v945 = vunpack.c.l.b16 %v832
        %v946 = vunpack.c.l.b16 %v833
        %v947 = vunpack.c.l.b16 %v834
        %v948 = vunpack.c.l.b16 %v835
        %v949 = vunpack.c.l.b16 %v836
        %v950 = vunpack.c.l.b16 %v837
        %v951 = vunpack.c.l.b16 %v838
        %v952 = vunpack.c.l.b16 %v839
        %v953 = vunpack.c.l.b16 %v840
        %v954 = vunpack.c.l.b16 %v841
        %v955 = vunpack.c.l.b16 %v842
        %v956 = vunpack.c.l.b16 %v843
        %v957 = vunpack.c.l.b16 %v844
        %v958 = vunpack.c.l.b16 %v845
        %v959 = vpack.c.b16 %v944, %v943
        %v960 = vpack.c.b16 %v946, %v945
        %v961 = vpack.c.b16 %v948, %v947
        %v962 = vpack.c.b16 %v950, %v949
        %v963 = vpack.c.b16 %v952, %v951
        %v964 = vpack.c.b16 %v954, %v953
        %v965 = vpack.c.b16 %v956, %v955
        %v966 = vpack.c.b16 %v958, %v957
        %975 = vmatpush.bf16.msra.mxu0 %v966
        %976 = vmatpush.bf16.msra.mxu0 %v965
        %977 = vmatpush.bf16.msra.mxu0 %v964
        %978 = vmatpush.bf16.msra.mxu0 %v963
        %979 = vmatpush.bf16.msra.mxu0 %v962
        %980 = vmatpush.bf16.msra.mxu0 %v961
        %981 = vmatpush.bf16.msra.mxu0 %v960
        %982 = vmatpush.bf16.msra.mxu0 %v959
        %983 = vmatmul.bf16.gmra.mxu0 %v829
        %v984 = vpop.f32.mrf.mxu0
        %v985 = vadd.f32 %v923, %v984
        %v986 = vpop.f32.mrf.mxu0
        %v987 = vadd.f32 %v925, %v986
        %988 = vdwg.mxu0
        %v989 = vld [vmem:[#allocation9 + $0x3] sm:$0x1]
        %v990 = vperm.slane %v989, 0
        %v991 = vadd.f32 %v985, %v990
        %v992 = vadd.f32 %v987, %v990
        %v993 = vmax.f32 %v991, 0.0
        %v994 = vmax.f32 %v992, 0.0
        %v995 = vld [vmem:[#allocation2 + $0x8] sm:$0xff]
        %v996 = vld [vmem:[#allocation2 + $0x10] sm:$0xff]
        %v997 = vld [vmem:[#allocation7 + $0x240] sm:$0xf]
        %v998 = vld [vmem:[#allocation7 + $0x244] sm:$0xf]
        %v999 = vld [vmem:[#allocation7 + $0x248] sm:$0xf]
        %v1000 = vld [vmem:[#allocation7 + $0x24c] sm:$0xf]
        %v1001 = vld [vmem:[#allocation7 + $0x250] sm:$0xf]
        %v1002 = vld [vmem:[#allocation7 + $0x254] sm:$0xf]
        %v1003 = vld [vmem:[#allocation7 + $0x258] sm:$0xf]
        %v1004 = vld [vmem:[#allocation7 + $0x25c] sm:$0xf]
        %v1005 = vld [vmem:[#allocation7 + $0x260] sm:$0xf]
        %v1006 = vld [vmem:[#allocation7 + $0x264] sm:$0xf]
        %v1007 = vld [vmem:[#allocation7 + $0x268] sm:$0xf]
        %v1008 = vld [vmem:[#allocation7 + $0x26c] sm:$0xf]
        %v1009 = vld [vmem:[#allocation7 + $0x270] sm:$0xf]
        %v1010 = vld [vmem:[#allocation7 + $0x274] sm:$0xf]
        %v1011 = vld [vmem:[#allocation7 + $0x278] sm:$0xf]
        %v1012 = vld [vmem:[#allocation7 + $0x27c] sm:$0xf]
        %v1013 = vpack.c.bf16 %v996, %v995
        %v1014 = vld [vmem:[#allocation9 + $0x5] sm:$0x1]
        %v1015 = vperm.slane %v1014, 0
        %v1032 = vunpack.c.l.b16 %v997
        %v1033 = vunpack.c.l.b16 %v998
        %v1034 = vunpack.c.l.b16 %v999
        %v1035 = vunpack.c.l.b16 %v1000
        %v1036 = vunpack.c.l.b16 %v1001
        %v1037 = vunpack.c.l.b16 %v1002
        %v1038 = vunpack.c.l.b16 %v1003
        %v1039 = vunpack.c.l.b16 %v1004
        %v1040 = vunpack.c.l.b16 %v1005
        %v1041 = vunpack.c.l.b16 %v1006
        %v1042 = vunpack.c.l.b16 %v1007
        %v1043 = vunpack.c.l.b16 %v1008
        %v1044 = vunpack.c.l.b16 %v1009
        %v1045 = vunpack.c.l.b16 %v1010
        %v1046 = vunpack.c.l.b16 %v1011
        %v1047 = vunpack.c.l.b16 %v1012
        %v1048 = vpack.c.b16 %v1033, %v1032
        %v1049 = vpack.c.b16 %v1035, %v1034
        %v1050 = vpack.c.b16 %v1037, %v1036
        %v1051 = vpack.c.b16 %v1039, %v1038
        %v1052 = vpack.c.b16 %v1041, %v1040
        %v1053 = vpack.c.b16 %v1043, %v1042
        %v1054 = vpack.c.b16 %v1045, %v1044
        %v1055 = vpack.c.b16 %v1047, %v1046
        %1064 = vmatpush.bf16.msra.mxu0 %v1055
        %1065 = vmatpush.bf16.msra.mxu0 %v1054
        %1066 = vmatpush.bf16.msra.mxu0 %v1053
        %1067 = vmatpush.bf16.msra.mxu0 %v1052
        %1068 = vmatpush.bf16.msra.mxu0 %v1051
        %1069 = vmatpush.bf16.msra.mxu0 %v1050
        %1070 = vmatpush.bf16.msra.mxu0 %v1049
        %1071 = vmatpush.bf16.msra.mxu0 %v1048
        %1072 = vmatmul.bf16.gmra.mxu0 %v1013
        %v1073 = vpop.f32.mrf.mxu0
        %v1074 = vadd.f32 %v1015, %v1073
        %v1075 = vpop.f32.mrf.mxu0
        %v1076 = vadd.f32 %v1015, %v1075
        %1077 = vdwg.mxu0
        %v1078 = vadd.f32 %v993, %v1074
        %v1079 = vadd.f32 %v994, %v1076
        %v1080 = vmax.f32 %v1078, 0.0
        %v1081 = vmax.f32 %v1079, 0.0
        %1082 = vst [vmem:[#allocation2 + $0x8] sm:$0xff] %v1080
        %1083 = vst [vmem:[#allocation2 + $0x10] sm:$0xff] %v1081
        %v1084 = vld [vmem:[#allocation2 + $0x10] sm:$0xff]
        %v1085 = vpack.c.bf16 %v1084, %v1084
        %v1086 = vld [vmem:[#allocation7 + $0x280] sm:$0xf]
        %v1087 = vld [vmem:[#allocation7 + $0x284] sm:$0xf]
        %v1088 = vld [vmem:[#allocation7 + $0x288] sm:$0xf]
        %v1089 = vld [vmem:[#allocation7 + $0x28c] sm:$0xf]
        %v1090 = vld [vmem:[#allocation7 + $0x290] sm:$0xf]
        %v1091 = vld [vmem:[#allocation7 + $0x294] sm:$0xf]
        %v1092 = vld [vmem:[#allocation7 + $0x298] sm:$0xf]
        %v1093 = vld [vmem:[#allocation7 + $0x29c] sm:$0xf]
        %v1094 = vld [vmem:[#allocation7 + $0x2a0] sm:$0xf]
        %v1095 = vld [vmem:[#allocation7 + $0x2a4] sm:$0xf]
        %v1096 = vld [vmem:[#allocation7 + $0x2a8] sm:$0xf]
        %v1097 = vld [vmem:[#allocation7 + $0x2ac] sm:$0xf]
        %v1098 = vld [vmem:[#allocation7 + $0x2b0] sm:$0xf]
        %v1099 = vld [vmem:[#allocation7 + $0x2b4] sm:$0xf]
        %v1100 = vld [vmem:[#allocation7 + $0x2b8] sm:$0xf]
        %v1101 = vld [vmem:[#allocation7 + $0x2bc] sm:$0xf]
        %v1102 = vld [vmem:[#allocation9 + $0x6] sm:$0x1]
        %v1103 = vperm.slane %v1102, 0
        %v1120 = vunpack.c.l.b16 %v1086
        %v1121 = vunpack.c.l.b16 %v1087
        %v1122 = vunpack.c.l.b16 %v1088
        %v1123 = vunpack.c.l.b16 %v1089
        %v1124 = vunpack.c.l.b16 %v1090
        %v1125 = vunpack.c.l.b16 %v1091
        %v1126 = vunpack.c.l.b16 %v1092
        %v1127 = vunpack.c.l.b16 %v1093
        %v1128 = vunpack.c.l.b16 %v1094
        %v1129 = vunpack.c.l.b16 %v1095
        %v1130 = vunpack.c.l.b16 %v1096
        %v1131 = vunpack.c.l.b16 %v1097
        %v1132 = vunpack.c.l.b16 %v1098
        %v1133 = vunpack.c.l.b16 %v1099
        %v1134 = vunpack.c.l.b16 %v1100
        %v1135 = vunpack.c.l.b16 %v1101
        %v1136 = vpack.c.b16 %v1121, %v1120
        %v1137 = vpack.c.b16 %v1123, %v1122
        %v1138 = vpack.c.b16 %v1125, %v1124
        %v1139 = vpack.c.b16 %v1127, %v1126
        %v1140 = vpack.c.b16 %v1129, %v1128
        %v1141 = vpack.c.b16 %v1131, %v1130
        %v1142 = vpack.c.b16 %v1133, %v1132
        %v1143 = vpack.c.b16 %v1135, %v1134
        %1152 = vmatpush.bf16.msra.mxu0 %v1143
        %1153 = vmatpush.bf16.msra.mxu0 %v1142
        %1154 = vmatpush.bf16.msra.mxu0 %v1141
        %1155 = vmatpush.bf16.msra.mxu0 %v1140
        %1156 = vmatpush.bf16.msra.mxu0 %v1139
        %1157 = vmatpush.bf16.msra.mxu0 %v1138
        %1158 = vmatpush.bf16.msra.mxu0 %v1137
        %1159 = vmatpush.bf16.msra.mxu0 %v1136
        %1160 = vmatmul.bf16.gmra.mxu0 %v1085
        %v1161 = vpop.f32.mrf.mxu0
        %v1162 = vadd.f32 %v1103, %v1161
        %v1163 = vpop.f32.mrf.mxu0
        %1164 = vdwg.mxu0
        %1165 = vst [vmem:[%s221] sm:$0xff] %v1162
        %s1166 = sand.u32 %s97, 1
        %s1167 = scalar_lea.sflag [#allocation6], %s1166
        %s1168 = sand.u32 %s97, 1
        %s1169 = smul.addr %s1168, 8
        %s1170 = scalar_lea.vmem [#allocation10], %s1169
        // Predicated region
        $region45: #{tpu_custom_call.1} parent=31 // pred_check
          %p1171 = pneg %p107
        $region46: #{tpu_custom_call.1} parent=31 // pred_check_branch
          %1173 = sbr.rel (%p1171) target = $region48
        $region47: #{tpu_custom_call.1} parent=31 // pred_region
          %1175 = vsyncadd %s1167, 0
          %s1176 = smul.addr %s21, 8
          %s1177 = scalar_lea.hbm %s3, %s1176
          %s1179 = sshll.u32 %s1170, 4
          %s1180 = int_to_ptr.vmem [resolvable:$true] %s1179
          %s1181 = sshll.u32 %s1177, 4
          %s1182 = int_to_ptr.hbm [resolvable:$true] %s1181
          %1184 = dma.vmem_to_hbm [thread:$0]  %s1180, 128, %s1182, %s1167
        $region48: #{tpu_custom_call.1} parent=31 // pred_fallthru
          _
      $region32: #{tpu_custom_call.1} parent=5 // pred_fallthru
        _
      %p1185 = scmp.le.s32.totalorder 2, %s16
      // Predicated region
      $region49: #{tpu_custom_call.1} parent=5 // pred_check
        %p1186 = pneg %p1185
      $region50: #{tpu_custom_call.1} parent=5 // pred_check_branch
        %1188 = sbr.rel (%p1186) target = $region52
      $region51: #{tpu_custom_call.1} parent=5 // pred_region
        %s1189 = ssub.s32 %s16, 2
        // Predicated region
        $region53: #{tpu_custom_call.1} parent=51 // pred_check
          %p1190 = pneg %p113
        $region54: #{tpu_custom_call.1} parent=51 // pred_check_branch
          %1192 = sbr.rel (%p1190) target = $region56
        $region55: #{tpu_custom_call.1} parent=51 // pred_region
          %s1193 = sand.u32 %s98, 1
          %s1194 = scalar_lea.sflag [#allocation6], %s1193
          %s1195 = sand.u32 %s98, 1
          %s1196 = smul.addr %s1195, 8
          %s1197 = scalar_lea.vmem [#allocation10], %s1196
          %1199 = dma.done %s1194, 128
        $region56: #{tpu_custom_call.1} parent=51 // pred_fallthru
          _
      $region52: #{tpu_custom_call.1} parent=5 // pred_fallthru
        _
    $region6: #{tpu_custom_call.1} parent=1 // loop_footer
      %s20 = sadd.s32 1, %s16
    $region7: #{tpu_custom_call.1} parent=1 // loop_footer_branch
      %15 = sbr.rel target = $region3
    $region8: #{tpu_custom_call.1} parent=1 // loop_exit
      _
    %1200 = vsyncpa [#allocation5], 1
    %s1201 = scalar_lea.sflag [#allocation5], 1
    %1202 = vsyncpa %s1201, 1
    %1203 = vsyncpa [#allocation8], 1
    %1204 = vsyncpa [#allocation6], 1
    %s1205 = scalar_lea.sflag [#allocation6], 1
    %1206 = vsyncpa %s1205, 1

</llo_original>
